<compile_context>
chip_gen: v5e
topology: v5e:2x2
jax: 0.10.0
libtpu: 0.0.40
codegen_flags: <defaults>
</compile_context>

<pallas_src>
import jax
import jax.numpy as jnp
from jax.experimental import pallas as pl
from jax.experimental.pallas import tpu as pltpu


def lstm_regression_kernel(x_ref, wih_ref, whh_ref, b_ref, wout_ref, bout_ref,
                           out_ref):
    # Static shapes:
    #   x_ref    : (S*Bp, E)   -- pre-flattened in the wrapper
    #   wih_ref  : (E, 4H)
    #   whh_ref  : (H, 4H)
    #   b_ref    : (1, 4H)     -- b_ih + b_hh folded
    #   wout_ref : (1, H)
    #   bout_ref : (1, 1)
    #   out_ref  : (Bp, S)     -- lane-dense output; wrapper transposes
    Bp, S = out_ref.shape
    H = whh_ref.shape[0]

    # ---- Phase 1: input projection for ALL timesteps (ONE MXU matmul),
    # kept as a value in vregs (no VMEM scratch round-trip).
    zx = jnp.dot(x_ref[...], wih_ref[...],
                 preferred_element_type=jnp.float32) + b_ref[...]   # (S*Bp, 4H)

    w_hh = whh_ref[...]          # (H, 4H), hoisted out of the loop
    w_row = wout_ref[...]        # (1, H)

    # ---- Phase 2: sequential recurrence, fully unrolled; h/c stay in vregs.
    h = jnp.zeros((Bp, H), jnp.float32)   # PyTorch default h0 = 0
    c = jnp.zeros((Bp, H), jnp.float32)   # PyTorch default c0 = 0
    outs = []
    for t in range(S):
        zx_t = zx[t * Bp:(t + 1) * Bp, :]          # sublane-aligned static slice
        z = zx_t + jnp.dot(h, w_hh, preferred_element_type=jnp.float32)
        # 3 EUP pushes per step: full-vreg tanh for the sigmoid gates
        # (sigmoid(x) = 0.5*(1 + tanh(x/2))), full-vreg tanh for the cell gate,
        # and tanh(c_new).  Gate slices come off the two full-width results;
        # lane realignment only happens for the c/h elementwise math.
        sig = 0.5 * jnp.tanh(0.5 * z) + 0.5        # sigmoid over all 4H lanes
        th = jnp.tanh(z)
        # PyTorch gate order [i, f, g, o].
        i_g = sig[:, 0 * H:1 * H]
        f_g = sig[:, 1 * H:2 * H]
        g_g = th[:, 2 * H:3 * H]
        o_g = sig[:, 3 * H:4 * H]
        c = f_g * c + i_g * g_g
        h = o_g * jnp.tanh(c)
        # hidden2count (H -> 1): VPU multiply + XLU lane reduce, off the h->h
        # critical path (overlaps the next step's recurrent matmul).
        outs.append(jnp.sum(h * w_row, axis=-1, keepdims=True))     # (Bp, 1)

    # ---- Phase 3: single lane-dense store of the whole output. ----
    out_ref[...] = jnp.concatenate(outs, axis=1) + bout_ref[...]    # (Bp, S)


def lstm_regression(x, w_ih, w_hh, b_ih, b_hh, w_out, b_out):
    """x: (S, B, E) f32 (nn.LSTM default layout).  Returns (S, B, 1) f32."""
    x = jnp.asarray(x, jnp.float32)
    S, B, E = x.shape
    H = w_hh.shape[1]
    assert w_ih.shape == (4 * H, E)
    assert w_hh.shape == (4 * H, H)

    # Pad batch to the f32 sublane tile (8); sliced back after the call.
    Bp = max(8, ((B + 7) // 8) * 8)
    if Bp != B:
        x = jnp.pad(x, ((0, 0), (0, Bp - B), (0, 0)))
    x2d = x.reshape(S * Bp, E)     # pre-flatten in the wrapper: no in-kernel reshape

    wih_t = jnp.asarray(w_ih.T, jnp.float32)                      # (E, 4H)
    whh_t = jnp.asarray(w_hh.T, jnp.float32)                      # (H, 4H)
    b = jnp.asarray((b_ih + b_hh).reshape(1, 4 * H), jnp.float32)
    wout_row = jnp.asarray(w_out.reshape(1, H), jnp.float32)      # (1, H)
    bout = jnp.asarray(b_out.reshape(1, 1), jnp.float32)          # (1, 1)

    vmem = pltpu.MemorySpace.VMEM
    cost = pl.CostEstimate(
        flops=2 * S * Bp * 4 * H * (E + H) + 12 * S * Bp * H,
        transcendentals=S * Bp * (2 * 4 * H + H),
        bytes_accessed=4 * (S * Bp * E + (E + H) * 4 * H + 4 * H + H + 1
                            + S * Bp),
    )

    out = pl.pallas_call(
        lstm_regression_kernel,
        out_shape=jax.ShapeDtypeStruct((Bp, S), jnp.float32),
        in_specs=[pl.BlockSpec(memory_space=vmem)] * 6,
        out_specs=pl.BlockSpec(memory_space=vmem),
        cost_estimate=cost,
    )(x2d, wih_t, whh_t, b, wout_row, bout)

    # (Bp, S) -> (S, B, 1)
    return out[:B, :].T[:, :, None]


def lstm_regression_ref(x, w_ih, w_hh, b_ih, b_hh, w_out, b_out):
    """Pure-JAX reference matching torch.nn.LSTM + Linear semantics."""
    S, B, E = x.shape
    H = w_hh.shape[1]
    b = b_ih + b_hh

    def step(carry, x_t):
        h, c = carry
        z = x_t @ w_ih.T + h @ w_hh.T + b
        i = jax.nn.sigmoid(z[:, 0 * H:1 * H])
        f = jax.nn.sigmoid(z[:, 1 * H:2 * H])
        g = jnp.tanh(z[:, 2 * H:3 * H])
        o = jax.nn.sigmoid(z[:, 3 * H:4 * H])
        c_new = f * c + i * g
        h_new = o * jnp.tanh(c_new)
        return (h_new, c_new), h_new

    h0 = jnp.zeros((B, H), jnp.float32)
    c0 = jnp.zeros((B, H), jnp.float32)
    _, hs = jax.lax.scan(step, (h0, c0), x)
    return hs @ w_out.T + b_out


if __name__ == "__main__":
    # Small shapes consistent with the module: seq=8, batch=4, embed=16, hidden=32.
    S, B, E, H = 8, 4, 16, 32

    key = jax.random.PRNGKey(0)
    ks = jax.random.split(key, 7)
    bound = 1.0 / (H ** 0.5)   # PyTorch default uniform(-1/sqrt(H), 1/sqrt(H))

    x = jax.random.normal(ks[0], (S, B, E), jnp.float32)
    w_ih = jax.random.uniform(ks[1], (4 * H, E), jnp.float32, -bound, bound)
    w_hh = jax.random.uniform(ks[2], (4 * H, H), jnp.float32, -bound, bound)
    b_ih = jax.random.uniform(ks[3], (4 * H,), jnp.float32, -bound, bound)
    b_hh = jax.random.uniform(ks[4], (4 * H,), jnp.float32, -bound, bound)
    w_out = jax.random.uniform(ks[5], (1, H), jnp.float32, -bound, bound)
    b_out = jax.random.uniform(ks[6], (1,), jnp.float32, -bound, bound)

    out = lstm_regression(x, w_ih, w_hh, b_ih, b_hh, w_out, b_out)
    out = jax.block_until_ready(out)

    ref = lstm_regression_ref(x, w_ih, w_hh, b_ih, b_hh, w_out, b_out)
    assert out.shape == (S, B, 1), out.shape
    assert jnp.allclose(out, ref, atol=1e-5, rtol=1e-5), \
        float(jnp.max(jnp.abs(out - ref)))

    print("KERNEL_OK")
</pallas_src>

<mosaic_0001>
module attributes {stable_mosaic.version = 11 : i64} {
  func.func @lstm_regression_kernel(%arg0: memref<64x16xf32, #tpu.memory_space<vmem>>, %arg1: memref<16x128xf32, #tpu.memory_space<vmem>>, %arg2: memref<32x128xf32, #tpu.memory_space<vmem>>, %arg3: memref<1x128xf32, #tpu.memory_space<vmem>>, %arg4: memref<1x32xf32, #tpu.memory_space<vmem>>, %arg5: memref<1x1xf32, #tpu.memory_space<vmem>>, %arg6: memref<8x8xf32, #tpu.memory_space<vmem>>) attributes {dimension_semantics = [], scalar_prefetch = 0 : i64, scratch_operands = 0 : i64, tpu.core_type = #tpu.core_type<tc>} {
    %c0 = arith.constant 0 : index
    %c0_0 = arith.constant 0 : index
    %0 = vector.load %arg0[%c0, %c0_0] : memref<64x16xf32, #tpu.memory_space<vmem>>, vector<64x16xf32>
    %c0_1 = arith.constant 0 : index
    %c0_2 = arith.constant 0 : index
    %1 = vector.load %arg1[%c0_1, %c0_2] : memref<16x128xf32, #tpu.memory_space<vmem>>, vector<16x128xf32>
    %cst = arith.constant dense<0.000000e+00> : vector<64x128xf32>
    %2 = tpu.matmul %0, %1, %cst {dimension_numbers = #tpu.dot_dimension_numbers<[1], [0], [0], [1], [0, 0, 1, 1], [], []>} : vector<64x16xf32>, vector<16x128xf32>, vector<64x128xf32> -> vector<64x128xf32>
    %c0_3 = arith.constant 0 : index
    %c0_4 = arith.constant 0 : index
    %3 = vector.load %arg3[%c0_3, %c0_4] : memref<1x128xf32, #tpu.memory_space<vmem>>, vector<1x128xf32>
    %4 = vector.broadcast %3 : vector<1x128xf32> to vector<64x128xf32>
    %5 = arith.addf %2, %4 : vector<64x128xf32>
    %c0_5 = arith.constant 0 : index
    %c0_6 = arith.constant 0 : index
    %6 = vector.load %arg2[%c0_5, %c0_6] : memref<32x128xf32, #tpu.memory_space<vmem>>, vector<32x128xf32>
    %c0_7 = arith.constant 0 : index
    %c0_8 = arith.constant 0 : index
    %7 = vector.load %arg4[%c0_7, %c0_8] : memref<1x32xf32, #tpu.memory_space<vmem>>, vector<1x32xf32>
    %cst_9 = arith.constant 0.000000e+00 : f32
    %8 = vector.broadcast %cst_9 : f32 to vector<8x32xf32>
    %cst_10 = arith.constant 0.000000e+00 : f32
    %9 = vector.broadcast %cst_10 : f32 to vector<8x32xf32>
    %10 = vector.extract_strided_slice %5 {offsets = [0, 0], sizes = [8, 128], strides = [1, 1]} : vector<64x128xf32> to vector<8x128xf32>
    %cst_11 = arith.constant dense<0.000000e+00> : vector<8x128xf32>
    %11 = tpu.matmul %8, %6, %cst_11 {dimension_numbers = #tpu.dot_dimension_numbers<[1], [0], [0], [1], [0, 0, 1, 1], [], []>} : vector<8x32xf32>, vector<32x128xf32>, vector<8x128xf32> -> vector<8x128xf32>
    %12 = arith.addf %10, %11 : vector<8x128xf32>
    %cst_12 = arith.constant 5.000000e-01 : f32
    %13 = vector.broadcast %cst_12 : f32 to vector<8x128xf32>
    %14 = arith.mulf %13, %12 : vector<8x128xf32>
    %15 = math.tanh %14 : vector<8x128xf32>
    %cst_13 = arith.constant 5.000000e-01 : f32
    %16 = vector.broadcast %cst_13 : f32 to vector<8x128xf32>
    %17 = arith.mulf %16, %15 : vector<8x128xf32>
    %cst_14 = arith.constant 5.000000e-01 : f32
    %18 = vector.broadcast %cst_14 : f32 to vector<8x128xf32>
    %19 = arith.addf %17, %18 : vector<8x128xf32>
    %20 = math.tanh %12 : vector<8x128xf32>
    %21 = vector.extract_strided_slice %19 {offsets = [0, 0], sizes = [8, 32], strides = [1, 1]} : vector<8x128xf32> to vector<8x32xf32>
    %22 = vector.extract_strided_slice %19 {offsets = [0, 32], sizes = [8, 32], strides = [1, 1]} : vector<8x128xf32> to vector<8x32xf32>
    %23 = vector.extract_strided_slice %20 {offsets = [0, 64], sizes = [8, 32], strides = [1, 1]} : vector<8x128xf32> to vector<8x32xf32>
    %24 = vector.extract_strided_slice %19 {offsets = [0, 96], sizes = [8, 32], strides = [1, 1]} : vector<8x128xf32> to vector<8x32xf32>
    %25 = arith.mulf %22, %9 : vector<8x32xf32>
    %26 = arith.mulf %21, %23 : vector<8x32xf32>
    %27 = arith.addf %25, %26 : vector<8x32xf32>
    %28 = math.tanh %27 : vector<8x32xf32>
    %29 = arith.mulf %24, %28 : vector<8x32xf32>
    %30 = vector.broadcast %7 : vector<1x32xf32> to vector<8x32xf32>
    %31 = arith.mulf %29, %30 : vector<8x32xf32>
    %cst_15 = arith.constant dense<0.000000e+00> : vector<8xf32>
    %32 = vector.multi_reduction <add>, %31, %cst_15 [1] : vector<8x32xf32> to vector<8xf32>
    %33 = vector.shape_cast %32 : vector<8xf32> to vector<8x1xf32>
    %34 = vector.extract_strided_slice %5 {offsets = [8, 0], sizes = [8, 128], strides = [1, 1]} : vector<64x128xf32> to vector<8x128xf32>
    %cst_16 = arith.constant dense<0.000000e+00> : vector<8x128xf32>
    %35 = tpu.matmul %29, %6, %cst_16 {dimension_numbers = #tpu.dot_dimension_numbers<[1], [0], [0], [1], [0, 0, 1, 1], [], []>} : vector<8x32xf32>, vector<32x128xf32>, vector<8x128xf32> -> vector<8x128xf32>
    %36 = arith.addf %34, %35 : vector<8x128xf32>
    %cst_17 = arith.constant 5.000000e-01 : f32
    %37 = vector.broadcast %cst_17 : f32 to vector<8x128xf32>
    %38 = arith.mulf %37, %36 : vector<8x128xf32>
    %39 = math.tanh %38 : vector<8x128xf32>
    %cst_18 = arith.constant 5.000000e-01 : f32
    %40 = vector.broadcast %cst_18 : f32 to vector<8x128xf32>
    %41 = arith.mulf %40, %39 : vector<8x128xf32>
    %cst_19 = arith.constant 5.000000e-01 : f32
    %42 = vector.broadcast %cst_19 : f32 to vector<8x128xf32>
    %43 = arith.addf %41, %42 : vector<8x128xf32>
    %44 = math.tanh %36 : vector<8x128xf32>
    %45 = vector.extract_strided_slice %43 {offsets = [0, 0], sizes = [8, 32], strides = [1, 1]} : vector<8x128xf32> to vector<8x32xf32>
    %46 = vector.extract_strided_slice %43 {offsets = [0, 32], sizes = [8, 32], strides = [1, 1]} : vector<8x128xf32> to vector<8x32xf32>
    %47 = vector.extract_strided_slice %44 {offsets = [0, 64], sizes = [8, 32], strides = [1, 1]} : vector<8x128xf32> to vector<8x32xf32>
    %48 = vector.extract_strided_slice %43 {offsets = [0, 96], sizes = [8, 32], strides = [1, 1]} : vector<8x128xf32> to vector<8x32xf32>
    %49 = arith.mulf %46, %27 : vector<8x32xf32>
    %50 = arith.mulf %45, %47 : vector<8x32xf32>
    %51 = arith.addf %49, %50 : vector<8x32xf32>
    %52 = math.tanh %51 : vector<8x32xf32>
    %53 = arith.mulf %48, %52 : vector<8x32xf32>
    %54 = vector.broadcast %7 : vector<1x32xf32> to vector<8x32xf32>
    %55 = arith.mulf %53, %54 : vector<8x32xf32>
    %cst_20 = arith.constant dense<0.000000e+00> : vector<8xf32>
    %56 = vector.multi_reduction <add>, %55, %cst_20 [1] : vector<8x32xf32> to vector<8xf32>
    %57 = vector.shape_cast %56 : vector<8xf32> to vector<8x1xf32>
    %58 = vector.extract_strided_slice %5 {offsets = [16, 0], sizes = [8, 128], strides = [1, 1]} : vector<64x128xf32> to vector<8x128xf32>
    %cst_21 = arith.constant dense<0.000000e+00> : vector<8x128xf32>
    %59 = tpu.matmul %53, %6, %cst_21 {dimension_numbers = #tpu.dot_dimension_numbers<[1], [0], [0], [1], [0, 0, 1, 1], [], []>} : vector<8x32xf32>, vector<32x128xf32>, vector<8x128xf32> -> vector<8x128xf32>
    %60 = arith.addf %58, %59 : vector<8x128xf32>
    %cst_22 = arith.constant 5.000000e-01 : f32
    %61 = vector.broadcast %cst_22 : f32 to vector<8x128xf32>
    %62 = arith.mulf %61, %60 : vector<8x128xf32>
    %63 = math.tanh %62 : vector<8x128xf32>
    %cst_23 = arith.constant 5.000000e-01 : f32
    %64 = vector.broadcast %cst_23 : f32 to vector<8x128xf32>
    %65 = arith.mulf %64, %63 : vector<8x128xf32>
    %cst_24 = arith.constant 5.000000e-01 : f32
    %66 = vector.broadcast %cst_24 : f32 to vector<8x128xf32>
    %67 = arith.addf %65, %66 : vector<8x128xf32>
    %68 = math.tanh %60 : vector<8x128xf32>
    %69 = vector.extract_strided_slice %67 {offsets = [0, 0], sizes = [8, 32], strides = [1, 1]} : vector<8x128xf32> to vector<8x32xf32>
    %70 = vector.extract_strided_slice %67 {offsets = [0, 32], sizes = [8, 32], strides = [1, 1]} : vector<8x128xf32> to vector<8x32xf32>
    %71 = vector.extract_strided_slice %68 {offsets = [0, 64], sizes = [8, 32], strides = [1, 1]} : vector<8x128xf32> to vector<8x32xf32>
    %72 = vector.extract_strided_slice %67 {offsets = [0, 96], sizes = [8, 32], strides = [1, 1]} : vector<8x128xf32> to vector<8x32xf32>
    %73 = arith.mulf %70, %51 : vector<8x32xf32>
    %74 = arith.mulf %69, %71 : vector<8x32xf32>
    %75 = arith.addf %73, %74 : vector<8x32xf32>
    %76 = math.tanh %75 : vector<8x32xf32>
    %77 = arith.mulf %72, %76 : vector<8x32xf32>
    %78 = vector.broadcast %7 : vector<1x32xf32> to vector<8x32xf32>
    %79 = arith.mulf %77, %78 : vector<8x32xf32>
    %cst_25 = arith.constant dense<0.000000e+00> : vector<8xf32>
    %80 = vector.multi_reduction <add>, %79, %cst_25 [1] : vector<8x32xf32> to vector<8xf32>
    %81 = vector.shape_cast %80 : vector<8xf32> to vector<8x1xf32>
    %82 = vector.extract_strided_slice %5 {offsets = [24, 0], sizes = [8, 128], strides = [1, 1]} : vector<64x128xf32> to vector<8x128xf32>
    %cst_26 = arith.constant dense<0.000000e+00> : vector<8x128xf32>
    %83 = tpu.matmul %77, %6, %cst_26 {dimension_numbers = #tpu.dot_dimension_numbers<[1], [0], [0], [1], [0, 0, 1, 1], [], []>} : vector<8x32xf32>, vector<32x128xf32>, vector<8x128xf32> -> vector<8x128xf32>
    %84 = arith.addf %82, %83 : vector<8x128xf32>
    %cst_27 = arith.constant 5.000000e-01 : f32
    %85 = vector.broadcast %cst_27 : f32 to vector<8x128xf32>
    %86 = arith.mulf %85, %84 : vector<8x128xf32>
    %87 = math.tanh %86 : vector<8x128xf32>
    %cst_28 = arith.constant 5.000000e-01 : f32
    %88 = vector.broadcast %cst_28 : f32 to vector<8x128xf32>
    %89 = arith.mulf %88, %87 : vector<8x128xf32>
    %cst_29 = arith.constant 5.000000e-01 : f32
    %90 = vector.broadcast %cst_29 : f32 to vector<8x128xf32>
    %91 = arith.addf %89, %90 : vector<8x128xf32>
    %92 = math.tanh %84 : vector<8x128xf32>
    %93 = vector.extract_strided_slice %91 {offsets = [0, 0], sizes = [8, 32], strides = [1, 1]} : vector<8x128xf32> to vector<8x32xf32>
    %94 = vector.extract_strided_slice %91 {offsets = [0, 32], sizes = [8, 32], strides = [1, 1]} : vector<8x128xf32> to vector<8x32xf32>
    %95 = vector.extract_strided_slice %92 {offsets = [0, 64], sizes = [8, 32], strides = [1, 1]} : vector<8x128xf32> to vector<8x32xf32>
    %96 = vector.extract_strided_slice %91 {offsets = [0, 96], sizes = [8, 32], strides = [1, 1]} : vector<8x128xf32> to vector<8x32xf32>
    %97 = arith.mulf %94, %75 : vector<8x32xf32>
    %98 = arith.mulf %93, %95 : vector<8x32xf32>
    %99 = arith.addf %97, %98 : vector<8x32xf32>
    %100 = math.tanh %99 : vector<8x32xf32>
    %101 = arith.mulf %96, %100 : vector<8x32xf32>
    %102 = vector.broadcast %7 : vector<1x32xf32> to vector<8x32xf32>
    %103 = arith.mulf %101, %102 : vector<8x32xf32>
    %cst_30 = arith.constant dense<0.000000e+00> : vector<8xf32>
    %104 = vector.multi_reduction <add>, %103, %cst_30 [1] : vector<8x32xf32> to vector<8xf32>
    %105 = vector.shape_cast %104 : vector<8xf32> to vector<8x1xf32>
    %106 = vector.extract_strided_slice %5 {offsets = [32, 0], sizes = [8, 128], strides = [1, 1]} : vector<64x128xf32> to vector<8x128xf32>
    %cst_31 = arith.constant dense<0.000000e+00> : vector<8x128xf32>
    %107 = tpu.matmul %101, %6, %cst_31 {dimension_numbers = #tpu.dot_dimension_numbers<[1], [0], [0], [1], [0, 0, 1, 1], [], []>} : vector<8x32xf32>, vector<32x128xf32>, vector<8x128xf32> -> vector<8x128xf32>
    %108 = arith.addf %106, %107 : vector<8x128xf32>
    %cst_32 = arith.constant 5.000000e-01 : f32
    %109 = vector.broadcast %cst_32 : f32 to vector<8x128xf32>
    %110 = arith.mulf %109, %108 : vector<8x128xf32>
    %111 = math.tanh %110 : vector<8x128xf32>
    %cst_33 = arith.constant 5.000000e-01 : f32
    %112 = vector.broadcast %cst_33 : f32 to vector<8x128xf32>
    %113 = arith.mulf %112, %111 : vector<8x128xf32>
    %cst_34 = arith.constant 5.000000e-01 : f32
    %114 = vector.broadcast %cst_34 : f32 to vector<8x128xf32>
    %115 = arith.addf %113, %114 : vector<8x128xf32>
    %116 = math.tanh %108 : vector<8x128xf32>
    %117 = vector.extract_strided_slice %115 {offsets = [0, 0], sizes = [8, 32], strides = [1, 1]} : vector<8x128xf32> to vector<8x32xf32>
    %118 = vector.extract_strided_slice %115 {offsets = [0, 32], sizes = [8, 32], strides = [1, 1]} : vector<8x128xf32> to vector<8x32xf32>
    %119 = vector.extract_strided_slice %116 {offsets = [0, 64], sizes = [8, 32], strides = [1, 1]} : vector<8x128xf32> to vector<8x32xf32>
    %120 = vector.extract_strided_slice %115 {offsets = [0, 96], sizes = [8, 32], strides = [1, 1]} : vector<8x128xf32> to vector<8x32xf32>
    %121 = arith.mulf %118, %99 : vector<8x32xf32>
    %122 = arith.mulf %117, %119 : vector<8x32xf32>
    %123 = arith.addf %121, %122 : vector<8x32xf32>
    %124 = math.tanh %123 : vector<8x32xf32>
    %125 = arith.mulf %120, %124 : vector<8x32xf32>
    %126 = vector.broadcast %7 : vector<1x32xf32> to vector<8x32xf32>
    %127 = arith.mulf %125, %126 : vector<8x32xf32>
    %cst_35 = arith.constant dense<0.000000e+00> : vector<8xf32>
    %128 = vector.multi_reduction <add>, %127, %cst_35 [1] : vector<8x32xf32> to vector<8xf32>
    %129 = vector.shape_cast %128 : vector<8xf32> to vector<8x1xf32>
    %130 = vector.extract_strided_slice %5 {offsets = [40, 0], sizes = [8, 128], strides = [1, 1]} : vector<64x128xf32> to vector<8x128xf32>
    %cst_36 = arith.constant dense<0.000000e+00> : vector<8x128xf32>
    %131 = tpu.matmul %125, %6, %cst_36 {dimension_numbers = #tpu.dot_dimension_numbers<[1], [0], [0], [1], [0, 0, 1, 1], [], []>} : vector<8x32xf32>, vector<32x128xf32>, vector<8x128xf32> -> vector<8x128xf32>
    %132 = arith.addf %130, %131 : vector<8x128xf32>
    %cst_37 = arith.constant 5.000000e-01 : f32
    %133 = vector.broadcast %cst_37 : f32 to vector<8x128xf32>
    %134 = arith.mulf %133, %132 : vector<8x128xf32>
    %135 = math.tanh %134 : vector<8x128xf32>
    %cst_38 = arith.constant 5.000000e-01 : f32
    %136 = vector.broadcast %cst_38 : f32 to vector<8x128xf32>
    %137 = arith.mulf %136, %135 : vector<8x128xf32>
    %cst_39 = arith.constant 5.000000e-01 : f32
    %138 = vector.broadcast %cst_39 : f32 to vector<8x128xf32>
    %139 = arith.addf %137, %138 : vector<8x128xf32>
    %140 = math.tanh %132 : vector<8x128xf32>
    %141 = vector.extract_strided_slice %139 {offsets = [0, 0], sizes = [8, 32], strides = [1, 1]} : vector<8x128xf32> to vector<8x32xf32>
    %142 = vector.extract_strided_slice %139 {offsets = [0, 32], sizes = [8, 32], strides = [1, 1]} : vector<8x128xf32> to vector<8x32xf32>
    %143 = vector.extract_strided_slice %140 {offsets = [0, 64], sizes = [8, 32], strides = [1, 1]} : vector<8x128xf32> to vector<8x32xf32>
    %144 = vector.extract_strided_slice %139 {offsets = [0, 96], sizes = [8, 32], strides = [1, 1]} : vector<8x128xf32> to vector<8x32xf32>
    %145 = arith.mulf %142, %123 : vector<8x32xf32>
    %146 = arith.mulf %141, %143 : vector<8x32xf32>
    %147 = arith.addf %145, %146 : vector<8x32xf32>
    %148 = math.tanh %147 : vector<8x32xf32>
    %149 = arith.mulf %144, %148 : vector<8x32xf32>
    %150 = vector.broadcast %7 : vector<1x32xf32> to vector<8x32xf32>
    %151 = arith.mulf %149, %150 : vector<8x32xf32>
    %cst_40 = arith.constant dense<0.000000e+00> : vector<8xf32>
    %152 = vector.multi_reduction <add>, %151, %cst_40 [1] : vector<8x32xf32> to vector<8xf32>
    %153 = vector.shape_cast %152 : vector<8xf32> to vector<8x1xf32>
    %154 = vector.extract_strided_slice %5 {offsets = [48, 0], sizes = [8, 128], strides = [1, 1]} : vector<64x128xf32> to vector<8x128xf32>
    %cst_41 = arith.constant dense<0.000000e+00> : vector<8x128xf32>
    %155 = tpu.matmul %149, %6, %cst_41 {dimension_numbers = #tpu.dot_dimension_numbers<[1], [0], [0], [1], [0, 0, 1, 1], [], []>} : vector<8x32xf32>, vector<32x128xf32>, vector<8x128xf32> -> vector<8x128xf32>
    %156 = arith.addf %154, %155 : vector<8x128xf32>
    %cst_42 = arith.constant 5.000000e-01 : f32
    %157 = vector.broadcast %cst_42 : f32 to vector<8x128xf32>
    %158 = arith.mulf %157, %156 : vector<8x128xf32>
    %159 = math.tanh %158 : vector<8x128xf32>
    %cst_43 = arith.constant 5.000000e-01 : f32
    %160 = vector.broadcast %cst_43 : f32 to vector<8x128xf32>
    %161 = arith.mulf %160, %159 : vector<8x128xf32>
    %cst_44 = arith.constant 5.000000e-01 : f32
    %162 = vector.broadcast %cst_44 : f32 to vector<8x128xf32>
    %163 = arith.addf %161, %162 : vector<8x128xf32>
    %164 = math.tanh %156 : vector<8x128xf32>
    %165 = vector.extract_strided_slice %163 {offsets = [0, 0], sizes = [8, 32], strides = [1, 1]} : vector<8x128xf32> to vector<8x32xf32>
    %166 = vector.extract_strided_slice %163 {offsets = [0, 32], sizes = [8, 32], strides = [1, 1]} : vector<8x128xf32> to vector<8x32xf32>
    %167 = vector.extract_strided_slice %164 {offsets = [0, 64], sizes = [8, 32], strides = [1, 1]} : vector<8x128xf32> to vector<8x32xf32>
    %168 = vector.extract_strided_slice %163 {offsets = [0, 96], sizes = [8, 32], strides = [1, 1]} : vector<8x128xf32> to vector<8x32xf32>
    %169 = arith.mulf %166, %147 : vector<8x32xf32>
    %170 = arith.mulf %165, %167 : vector<8x32xf32>
    %171 = arith.addf %169, %170 : vector<8x32xf32>
    %172 = math.tanh %171 : vector<8x32xf32>
    %173 = arith.mulf %168, %172 : vector<8x32xf32>
    %174 = vector.broadcast %7 : vector<1x32xf32> to vector<8x32xf32>
    %175 = arith.mulf %173, %174 : vector<8x32xf32>
    %cst_45 = arith.constant dense<0.000000e+00> : vector<8xf32>
    %176 = vector.multi_reduction <add>, %175, %cst_45 [1] : vector<8x32xf32> to vector<8xf32>
    %177 = vector.shape_cast %176 : vector<8xf32> to vector<8x1xf32>
    %178 = vector.extract_strided_slice %5 {offsets = [56, 0], sizes = [8, 128], strides = [1, 1]} : vector<64x128xf32> to vector<8x128xf32>
    %cst_46 = arith.constant dense<0.000000e+00> : vector<8x128xf32>
    %179 = tpu.matmul %173, %6, %cst_46 {dimension_numbers = #tpu.dot_dimension_numbers<[1], [0], [0], [1], [0, 0, 1, 1], [], []>} : vector<8x32xf32>, vector<32x128xf32>, vector<8x128xf32> -> vector<8x128xf32>
    %180 = arith.addf %178, %179 : vector<8x128xf32>
    %cst_47 = arith.constant 5.000000e-01 : f32
    %181 = vector.broadcast %cst_47 : f32 to vector<8x128xf32>
    %182 = arith.mulf %181, %180 : vector<8x128xf32>
    %183 = math.tanh %182 : vector<8x128xf32>
    %cst_48 = arith.constant 5.000000e-01 : f32
    %184 = vector.broadcast %cst_48 : f32 to vector<8x128xf32>
    %185 = arith.mulf %184, %183 : vector<8x128xf32>
    %cst_49 = arith.constant 5.000000e-01 : f32
    %186 = vector.broadcast %cst_49 : f32 to vector<8x128xf32>
    %187 = arith.addf %185, %186 : vector<8x128xf32>
    %188 = math.tanh %180 : vector<8x128xf32>
    %189 = vector.extract_strided_slice %187 {offsets = [0, 0], sizes = [8, 32], strides = [1, 1]} : vector<8x128xf32> to vector<8x32xf32>
    %190 = vector.extract_strided_slice %187 {offsets = [0, 32], sizes = [8, 32], strides = [1, 1]} : vector<8x128xf32> to vector<8x32xf32>
    %191 = vector.extract_strided_slice %188 {offsets = [0, 64], sizes = [8, 32], strides = [1, 1]} : vector<8x128xf32> to vector<8x32xf32>
    %192 = vector.extract_strided_slice %187 {offsets = [0, 96], sizes = [8, 32], strides = [1, 1]} : vector<8x128xf32> to vector<8x32xf32>
    %193 = arith.mulf %190, %171 : vector<8x32xf32>
    %194 = arith.mulf %189, %191 : vector<8x32xf32>
    %195 = arith.addf %193, %194 : vector<8x32xf32>
    %196 = math.tanh %195 : vector<8x32xf32>
    %197 = arith.mulf %192, %196 : vector<8x32xf32>
    %198 = vector.broadcast %7 : vector<1x32xf32> to vector<8x32xf32>
    %199 = arith.mulf %197, %198 : vector<8x32xf32>
    %cst_50 = arith.constant dense<0.000000e+00> : vector<8xf32>
    %200 = vector.multi_reduction <add>, %199, %cst_50 [1] : vector<8x32xf32> to vector<8xf32>
    %201 = vector.shape_cast %200 : vector<8xf32> to vector<8x1xf32>
    %202 = tpu.concatenate %33, %57, %81, %105, %129, %153, %177, %201 in 1 : vector<8x1xf32>, vector<8x1xf32>, vector<8x1xf32>, vector<8x1xf32>, vector<8x1xf32>, vector<8x1xf32>, vector<8x1xf32>, vector<8x1xf32> -> vector<8x8xf32>
    %c0_51 = arith.constant 0 : index
    %c0_52 = arith.constant 0 : index
    %203 = vector.load %arg5[%c0_51, %c0_52] : memref<1x1xf32, #tpu.memory_space<vmem>>, vector<1x1xf32>
    %204 = vector.broadcast %203 : vector<1x1xf32> to vector<8x8xf32>
    %205 = arith.addf %202, %204 : vector<8x8xf32>
    %c0_53 = arith.constant 0 : index
    %c0_54 = arith.constant 0 : index
    %206 = vector.load %arg6[%c0_53, %c0_54] : memref<8x8xf32, #tpu.memory_space<vmem>>, vector<8x8xf32>
    tpu.vector_store %arg6[%c0_53, %c0_54], %205 {strides = array<i32>} : memref<8x8xf32, #tpu.memory_space<vmem>>, vector<8x8xf32>,
    return
  }
}

</mosaic_0001>

<llo_original>
// kernel: tpu_custom_call.1
$region0: #{tpu_custom_call.1}
  #allocation0 [shape = 'u32[]', space=smem, size = 0x4, offset = 0x4, fixed_abs, tag = 'smem constant byte address 0x4 - core index']
  #allocation1 [shape = 'u32[72,128]{1,0:T(1,128)}', space=vmem, size = 0x9000, scoped, tag = 'internal scratch']
  #allocation2 [shape = 'f32[1,1]{1,0:T(1,128)S(1)}', space=vmem, size = 0x200, scoped, tag = 'scoped memory for tpu_custom_call.1']
  %s0 = inlined_call_operand.vmem [shape: f32[64,16], index: 0, kind: input, shape index: {}]
  %s1 = inlined_call_operand.vmem [shape: f32[16,128], index: 1, kind: input, shape index: {}]
  %s2 = inlined_call_operand.vmem [shape: f32[32,128], index: 2, kind: input, shape index: {}]
  %s3 = inlined_call_operand.vmem [shape: f32[1,128], index: 3, kind: input, shape index: {}]
  %s4 = inlined_call_operand.vmem [shape: f32[1,32], index: 4, kind: input, shape index: {}]
  %s5 = inlined_call_operand.<no memory space> [shape: f32[1,1], index: 5, kind: input, shape index: {}]
  %s6 = inlined_call_operand.hbm [shape: f32[8,8], index: 6, kind: output, shape index: {}]
  %s7 = sld [smem:[#allocation0]]
  $region34: #{tpu_custom_call.1} parent=0
    _
  %s9 = ssub.s32 1, %s7
  %s10 = scalar_select 0, %s9, %s7
  %v11 = vstv %s5
  %12 = vst [vmem:[#allocation2] sm:$0x1] %v11
  $region1: #{tpu_custom_call.1} parent=0
    #allocation3 [shape = 'u8[4096]{0}', space=vmem, size = 0x1000, scoped, tag = 'output window, operand 0, single buffered']
    #allocation4 [shape = 's32[1]{0}', space=sflag, size = 0x4, scoped, tag = 'scoped memory for tpu_custom_call.1']
    %13 = vsyncpa [#allocation4], 0
    // Predicated region
    $region2: #{tpu_custom_call.1} parent=1 // pred_check
      _
    $region3: #{tpu_custom_call.1} parent=1 // pred_check_branch
      %15 = sbr.rel (0) target = $region5
    $region4: #{tpu_custom_call.1} parent=1 // pred_region
      _
    $region5: #{tpu_custom_call.1} parent=1 // pred_fallthru
      _
    // Predicated region
    $region6: #{tpu_custom_call.1} parent=1 // pred_check
      _
    $region7: #{tpu_custom_call.1} parent=1 // pred_check_branch
      %17 = sbr.rel (0) target = $region9
    $region8: #{tpu_custom_call.1} parent=1 // pred_region
      _
    $region9: #{tpu_custom_call.1} parent=1 // pred_fallthru
      _
    // Predicated region
    $region10: #{tpu_custom_call.1} parent=1 // pred_check
      _
    $region11: #{tpu_custom_call.1} parent=1 // pred_check_branch
      %19 = sbr.rel (0) target = $region13
    $region12: #{tpu_custom_call.1} parent=1 // pred_region
      _
    $region13: #{tpu_custom_call.1} parent=1 // pred_fallthru
      _
    // Predicated region
    $region14: #{tpu_custom_call.1} parent=1 // pred_check
      _
    $region15: #{tpu_custom_call.1} parent=1 // pred_check_branch
      %21 = sbr.rel (0) target = $region17
    $region16: #{tpu_custom_call.1} parent=1 // pred_region
      _
    $region17: #{tpu_custom_call.1} parent=1 // pred_fallthru
      _
    // Predicated region
    $region18: #{tpu_custom_call.1} parent=1 // pred_check
      _
    $region19: #{tpu_custom_call.1} parent=1 // pred_check_branch
      %23 = sbr.rel (0) target = $region21
    $region20: #{tpu_custom_call.1} parent=1 // pred_region
      _
    $region21: #{tpu_custom_call.1} parent=1 // pred_fallthru
      _
    // Predicated region
    $region22: #{tpu_custom_call.1} parent=1 // pred_check
      _
    $region23: #{tpu_custom_call.1} parent=1 // pred_check_branch
      %25 = sbr.rel (0) target = $region25
    $region24: #{tpu_custom_call.1} parent=1 // pred_region
      _
    $region25: #{tpu_custom_call.1} parent=1 // pred_fallthru
      _
    %v26 = vld [vmem:[%s0] sm:$0xff]
    %v27 = vld [vmem:[%s0 + $0x8] sm:$0xff]
    %v28 = vld [vmem:[%s0 + $0x10] sm:$0xff]
    %v29 = vld [vmem:[%s0 + $0x18] sm:$0xff]
    %v30 = vld [vmem:[%s0 + $0x20] sm:$0xff]
    %v31 = vld [vmem:[%s0 + $0x28] sm:$0xff]
    %v32 = vld [vmem:[%s0 + $0x30] sm:$0xff]
    %v33 = vld [vmem:[%s0 + $0x38] sm:$0xff]
    %v34 = vld [vmem:[%s1] sm:$0xff]
    %v35 = vld [vmem:[%s1 + $0x8] sm:$0xff]
    %v36 = vld [vmem:[%s3] sm:$0x1]
    %v38 = vperm.slane %v36, 0
    %vm40 = vcmask 130048
    %v42 = vsel %vm40, %v26, 0
    %v45 = vsel %vm40, %v27, 0
    %v48 = vsel %vm40, %v28, 0
    %v51 = vsel %vm40, %v29, 0
    %v54 = vsel %vm40, %v30, 0
    %v57 = vsel %vm40, %v31, 0
    %v60 = vsel %vm40, %v32, 0
    %v63 = vsel %vm40, %v33, 0
    %65 = vmatpush.msra.mxu0 0.0
    %66 = vmatpush.msra.mxu0 0.0
    %67 = vmatpush.msra.mxu0 0.0
    %68 = vmatpush.msra.mxu0 0.0
    %69 = vmatpush.msra.mxu0 0.0
    %70 = vmatpush.msra.mxu0 0.0
    %71 = vmatpush.msra.mxu0 0.0
    %72 = vmatpush.msra.mxu0 0.0
    %73 = vmatpush.msra.mxu0 0.0
    %74 = vmatpush.msra.mxu0 0.0
    %75 = vmatpush.msra.mxu0 0.0
    %76 = vmatpush.msra.mxu0 0.0
    %77 = vmatpush.msra.mxu0 0.0
    %78 = vmatpush.msra.mxu0 0.0
    %79 = vmatpush.msra.mxu0 %v35
    %80 = vmatpush.msra.mxu0 %v34
    %81 = vmatmul.f32.gmra.mxu0 %v42
    %v82 = vpop.f32.mrf.mxu0
    %v83 = vadd.f32 %v38, %v82
    %84 = vmatmul.f32.gmra.mxu0 %v45
    %v85 = vpop.f32.mrf.mxu0
    %v86 = vadd.f32 %v38, %v85
    %87 = vmatmul.f32.gmra.mxu0 %v48
    %v88 = vpop.f32.mrf.mxu0
    %v89 = vadd.f32 %v38, %v88
    %90 = vmatmul.f32.gmra.mxu0 %v51
    %v91 = vpop.f32.mrf.mxu0
    %v92 = vadd.f32 %v38, %v91
    %93 = vmatmul.f32.gmra.mxu0 %v54
    %v94 = vpop.f32.mrf.mxu0
    %v95 = vadd.f32 %v38, %v94
    %96 = vmatmul.f32.gmra.mxu0 %v57
    %v97 = vpop.f32.mrf.mxu0
    %v98 = vadd.f32 %v38, %v97
    %99 = vmatmul.f32.gmra.mxu0 %v60
    %v100 = vpop.f32.mrf.mxu0
    %v101 = vadd.f32 %v38, %v100
    %102 = vmatmul.f32.gmra.mxu0 %v63
    %v103 = vpop.f32.mrf.mxu0
    %v104 = vadd.f32 %v38, %v103
    %105 = vdwg.mxu0
    %v106 = vld [vmem:[%s2] sm:$0xff]
    %v107 = vld [vmem:[%s2 + $0x8] sm:$0xff]
    %v108 = vld [vmem:[%s2 + $0x10] sm:$0xff]
    %v109 = vld [vmem:[%s2 + $0x18] sm:$0xff]
    %v110 = vld [vmem:[%s4] sm:$0x1]
    %vm111 = vcmask 261120
    %v113 = vsel %vm111, 0.0, 0
    %115 = vmatpush.msra.mxu0 0.0
    %116 = vmatpush.msra.mxu0 0.0
    %117 = vmatpush.msra.mxu0 0.0
    %118 = vmatpush.msra.mxu0 0.0
    %119 = vmatpush.msra.mxu0 0.0
    %120 = vmatpush.msra.mxu0 0.0
    %121 = vmatpush.msra.mxu0 0.0
    %122 = vmatpush.msra.mxu0 0.0
    %123 = vmatpush.msra.mxu0 0.0
    %124 = vmatpush.msra.mxu0 0.0
    %125 = vmatpush.msra.mxu0 0.0
    %126 = vmatpush.msra.mxu0 0.0
    %127 = vmatpush.msra.mxu0 %v109
    %128 = vmatpush.msra.mxu0 %v108
    %129 = vmatpush.msra.mxu0 %v107
    %130 = vmatpush.msra.mxu0 %v106
    %131 = vmatmul.f32.gmra.mxu0 %v113
    %v132 = vpop.f32.mrf.mxu0
    %v133 = vadd.f32 0.0, %v132
    %134 = vdwg.mxu0
    %v135 = vadd.f32 %v83, %v133
    %v136 = vmul.f32 %v135, 0.5
    %v137 = vtanh.pop %v136
    %v138 = vmul.f32 %v137, 0.5
    %v139 = vadd.f32 %v138, 0.5
    %v140 = vtanh.pop %v135
    %v141 = vmul.f32 %v139, 0.0
    %143 = vrot.lane.b32.xlu0 %v140, 64
    %v144 = vpop.permute.xlu0 %143
    %v146 = vmul.f32 %v139, %v144
    %148 = vrot.lane.b32.xlu0 %v146, 32
    %v149 = vpop.permute.xlu0 %148
    %v151 = vadd.f32 %v141, %v149
    %v152 = vtanh.pop %v151
    %154 = vrot.lane.b32.xlu0 %v152, 64
    %v155 = vpop.permute.xlu0 %154
    %v157 = vmul.f32 %v139, %v155
    %v159 = vperm.slane %v110, 0
    %160 = vrot.lane.b32.xlu0 %v159, 96
    %v161 = vpop.permute.xlu0 %160
    %v163 = vmul.f32 %v157, %v161
    %165 = vrot.lane.b32.xlu0 %v163, 32
    %v166 = vpop.permute.xlu0 %165
    %v168 = vsel %vm111, %v166, 0.0
    %169 = vadd.xlane.f32.xlu0 %v168
    %v170 = vpop.xlane.xlu0 %169
    %172 = vrot.lane.b32.xlu0 %v157, 32
    %v173 = vpop.permute.xlu0 %172
    %v174 = vsel %vm111, %v173, 0
    %176 = vmatpush.msra.mxu0 0.0
    %177 = vmatpush.msra.mxu0 0.0
    %178 = vmatpush.msra.mxu0 0.0
    %179 = vmatpush.msra.mxu0 0.0
    %180 = vmatpush.msra.mxu0 0.0
    %181 = vmatpush.msra.mxu0 0.0
    %182 = vmatpush.msra.mxu0 0.0
    %183 = vmatpush.msra.mxu0 0.0
    %184 = vmatpush.msra.mxu0 0.0
    %185 = vmatpush.msra.mxu0 0.0
    %186 = vmatpush.msra.mxu0 0.0
    %187 = vmatpush.msra.mxu0 0.0
    %188 = vmatpush.msra.mxu0 %v109
    %189 = vmatpush.msra.mxu0 %v108
    %190 = vmatpush.msra.mxu0 %v107
    %191 = vmatpush.msra.mxu0 %v106
    %192 = vmatmul.f32.gmra.mxu0 %v174
    %v193 = vpop.f32.mrf.mxu0
    %v194 = vadd.f32 0.0, %v193
    %195 = vdwg.mxu0
    %v196 = vadd.f32 %v86, %v194
    %v197 = vmul.f32 %v196, 0.5
    %v198 = vtanh.pop %v197
    %v199 = vmul.f32 %v198, 0.5
    %v200 = vadd.f32 %v199, 0.5
    %v201 = vtanh.pop %v196
    %v202 = vmul.f32 %v200, %v151
    %204 = vrot.lane.b32.xlu0 %v201, 64
    %v205 = vpop.permute.xlu0 %204
    %v207 = vmul.f32 %v200, %v205
    %209 = vrot.lane.b32.xlu0 %v207, 32
    %v210 = vpop.permute.xlu0 %209
    %v212 = vadd.f32 %v202, %v210
    %v213 = vtanh.pop %v212
    %215 = vrot.lane.b32.xlu0 %v213, 64
    %v216 = vpop.permute.xlu0 %215
    %v218 = vmul.f32 %v200, %v216
    %v219 = vmul.f32 %v218, %v161
    %221 = vrot.lane.b32.xlu0 %v219, 32
    %v222 = vpop.permute.xlu0 %221
    %v224 = vsel %vm111, %v222, 0.0
    %225 = vadd.xlane.f32.xlu0 %v224
    %v226 = vpop.xlane.xlu0 %225
    %228 = vrot.lane.b32.xlu0 %v218, 32
    %v229 = vpop.permute.xlu0 %228
    %v230 = vsel %vm111, %v229, 0
    %232 = vmatpush.msra.mxu0 0.0
    %233 = vmatpush.msra.mxu0 0.0
    %234 = vmatpush.msra.mxu0 0.0
    %235 = vmatpush.msra.mxu0 0.0
    %236 = vmatpush.msra.mxu0 0.0
    %237 = vmatpush.msra.mxu0 0.0
    %238 = vmatpush.msra.mxu0 0.0
    %239 = vmatpush.msra.mxu0 0.0
    %240 = vmatpush.msra.mxu0 0.0
    %241 = vmatpush.msra.mxu0 0.0
    %242 = vmatpush.msra.mxu0 0.0
    %243 = vmatpush.msra.mxu0 0.0
    %244 = vmatpush.msra.mxu0 %v109
    %245 = vmatpush.msra.mxu0 %v108
    %246 = vmatpush.msra.mxu0 %v107
    %247 = vmatpush.msra.mxu0 %v106
    %248 = vmatmul.f32.gmra.mxu0 %v230
    %v249 = vpop.f32.mrf.mxu0
    %v250 = vadd.f32 0.0, %v249
    %251 = vdwg.mxu0
    %v252 = vadd.f32 %v89, %v250
    %v253 = vmul.f32 %v252, 0.5
    %v254 = vtanh.pop %v253
    %v255 = vmul.f32 %v254, 0.5
    %v256 = vadd.f32 %v255, 0.5
    %v257 = vtanh.pop %v252
    %v258 = vmul.f32 %v256, %v212
    %260 = vrot.lane.b32.xlu0 %v257, 64
    %v261 = vpop.permute.xlu0 %260
    %v263 = vmul.f32 %v256, %v261
    %265 = vrot.lane.b32.xlu0 %v263, 32
    %v266 = vpop.permute.xlu0 %265
    %v268 = vadd.f32 %v258, %v266
    %v269 = vtanh.pop %v268
    %271 = vrot.lane.b32.xlu0 %v269, 64
    %v272 = vpop.permute.xlu0 %271
    %v274 = vmul.f32 %v256, %v272
    %v275 = vmul.f32 %v274, %v161
    %277 = vrot.lane.b32.xlu0 %v275, 32
    %v278 = vpop.permute.xlu0 %277
    %v280 = vsel %vm111, %v278, 0.0
    %281 = vadd.xlane.f32.xlu0 %v280
    %v282 = vpop.xlane.xlu0 %281
    %284 = vrot.lane.b32.xlu0 %v274, 32
    %v285 = vpop.permute.xlu0 %284
    %v286 = vsel %vm111, %v285, 0
    %288 = vmatpush.msra.mxu0 0.0
    %289 = vmatpush.msra.mxu0 0.0
    %290 = vmatpush.msra.mxu0 0.0
    %291 = vmatpush.msra.mxu0 0.0
    %292 = vmatpush.msra.mxu0 0.0
    %293 = vmatpush.msra.mxu0 0.0
    %294 = vmatpush.msra.mxu0 0.0
    %295 = vmatpush.msra.mxu0 0.0
    %296 = vmatpush.msra.mxu0 0.0
    %297 = vmatpush.msra.mxu0 0.0
    %298 = vmatpush.msra.mxu0 0.0
    %299 = vmatpush.msra.mxu0 0.0
    %300 = vmatpush.msra.mxu0 %v109
    %301 = vmatpush.msra.mxu0 %v108
    %302 = vmatpush.msra.mxu0 %v107
    %303 = vmatpush.msra.mxu0 %v106
    %304 = vmatmul.f32.gmra.mxu0 %v286
    %v305 = vpop.f32.mrf.mxu0
    %v306 = vadd.f32 0.0, %v305
    %307 = vdwg.mxu0
    %v308 = vadd.f32 %v92, %v306
    %v309 = vmul.f32 %v308, 0.5
    %v310 = vtanh.pop %v309
    %v311 = vmul.f32 %v310, 0.5
    %v312 = vadd.f32 %v311, 0.5
    %v313 = vtanh.pop %v308
    %v314 = vmul.f32 %v312, %v268
    %316 = vrot.lane.b32.xlu0 %v313, 64
    %v317 = vpop.permute.xlu0 %316
    %v319 = vmul.f32 %v312, %v317
    %321 = vrot.lane.b32.xlu0 %v319, 32
    %v322 = vpop.permute.xlu0 %321
    %v324 = vadd.f32 %v314, %v322
    %v325 = vtanh.pop %v324
    %327 = vrot.lane.b32.xlu0 %v325, 64
    %v328 = vpop.permute.xlu0 %327
    %v330 = vmul.f32 %v312, %v328
    %v331 = vmul.f32 %v330, %v161
    %333 = vrot.lane.b32.xlu0 %v331, 32
    %v334 = vpop.permute.xlu0 %333
    %v336 = vsel %vm111, %v334, 0.0
    %337 = vadd.xlane.f32.xlu0 %v336
    %v338 = vpop.xlane.xlu0 %337
    %340 = vrot.lane.b32.xlu0 %v330, 32
    %v341 = vpop.permute.xlu0 %340
    %v342 = vsel %vm111, %v341, 0
    %344 = vmatpush.msra.mxu0 0.0
    %345 = vmatpush.msra.mxu0 0.0
    %346 = vmatpush.msra.mxu0 0.0
    %347 = vmatpush.msra.mxu0 0.0
    %348 = vmatpush.msra.mxu0 0.0
    %349 = vmatpush.msra.mxu0 0.0
    %350 = vmatpush.msra.mxu0 0.0
    %351 = vmatpush.msra.mxu0 0.0
    %352 = vmatpush.msra.mxu0 0.0
    %353 = vmatpush.msra.mxu0 0.0
    %354 = vmatpush.msra.mxu0 0.0
    %355 = vmatpush.msra.mxu0 0.0
    %356 = vmatpush.msra.mxu0 %v109
    %357 = vmatpush.msra.mxu0 %v108
    %358 = vmatpush.msra.mxu0 %v107
    %359 = vmatpush.msra.mxu0 %v106
    %360 = vmatmul.f32.gmra.mxu0 %v342
    %v361 = vpop.f32.mrf.mxu0
    %v362 = vadd.f32 0.0, %v361
    %363 = vdwg.mxu0
    %v364 = vadd.f32 %v95, %v362
    %v365 = vmul.f32 %v364, 0.5
    %v366 = vtanh.pop %v365
    %v367 = vmul.f32 %v366, 0.5
    %v368 = vadd.f32 %v367, 0.5
    %v369 = vtanh.pop %v364
    %v370 = vmul.f32 %v368, %v324
    %372 = vrot.lane.b32.xlu0 %v369, 64
    %v373 = vpop.permute.xlu0 %372
    %v375 = vmul.f32 %v368, %v373
    %377 = vrot.lane.b32.xlu0 %v375, 32
    %v378 = vpop.permute.xlu0 %377
    %v380 = vadd.f32 %v370, %v378
    %v381 = vtanh.pop %v380
    %383 = vrot.lane.b32.xlu0 %v381, 64
    %v384 = vpop.permute.xlu0 %383
    %v386 = vmul.f32 %v368, %v384
    %v387 = vmul.f32 %v386, %v161
    %389 = vrot.lane.b32.xlu0 %v387, 32
    %v390 = vpop.permute.xlu0 %389
    %v392 = vsel %vm111, %v390, 0.0
    %393 = vadd.xlane.f32.xlu0 %v392
    %v394 = vpop.xlane.xlu0 %393
    %396 = vrot.lane.b32.xlu0 %v386, 32
    %v397 = vpop.permute.xlu0 %396
    %v398 = vsel %vm111, %v397, 0
    %400 = vmatpush.msra.mxu0 0.0
    %401 = vmatpush.msra.mxu0 0.0
    %402 = vmatpush.msra.mxu0 0.0
    %403 = vmatpush.msra.mxu0 0.0
    %404 = vmatpush.msra.mxu0 0.0
    %405 = vmatpush.msra.mxu0 0.0
    %406 = vmatpush.msra.mxu0 0.0
    %407 = vmatpush.msra.mxu0 0.0
    %408 = vmatpush.msra.mxu0 0.0
    %409 = vmatpush.msra.mxu0 0.0
    %410 = vmatpush.msra.mxu0 0.0
    %411 = vmatpush.msra.mxu0 0.0
    %412 = vmatpush.msra.mxu0 %v109
    %413 = vmatpush.msra.mxu0 %v108
    %414 = vmatpush.msra.mxu0 %v107
    %415 = vmatpush.msra.mxu0 %v106
    %416 = vmatmul.f32.gmra.mxu0 %v398
    %v417 = vpop.f32.mrf.mxu0
    %v418 = vadd.f32 0.0, %v417
    %419 = vdwg.mxu0
    %v420 = vadd.f32 %v98, %v418
    %v421 = vmul.f32 %v420, 0.5
    %v422 = vtanh.pop %v421
    %v423 = vmul.f32 %v422, 0.5
    %v424 = vadd.f32 %v423, 0.5
    %v425 = vtanh.pop %v420
    %v426 = vmul.f32 %v424, %v380
    %428 = vrot.lane.b32.xlu0 %v425, 64
    %v429 = vpop.permute.xlu0 %428
    %v431 = vmul.f32 %v424, %v429
    %433 = vrot.lane.b32.xlu0 %v431, 32
    %v434 = vpop.permute.xlu0 %433
    %v436 = vadd.f32 %v426, %v434
    %v437 = vtanh.pop %v436
    %439 = vrot.lane.b32.xlu0 %v437, 64
    %v440 = vpop.permute.xlu0 %439
    %v442 = vmul.f32 %v424, %v440
    %v443 = vmul.f32 %v442, %v161
    %445 = vrot.lane.b32.xlu0 %v443, 32
    %v446 = vpop.permute.xlu0 %445
    %v448 = vsel %vm111, %v446, 0.0
    %449 = vadd.xlane.f32.xlu0 %v448
    %v450 = vpop.xlane.xlu0 %449
    %452 = vrot.lane.b32.xlu0 %v442, 32
    %v453 = vpop.permute.xlu0 %452
    %v454 = vsel %vm111, %v453, 0
    %456 = vmatpush.msra.mxu0 0.0
    %457 = vmatpush.msra.mxu0 0.0
    %458 = vmatpush.msra.mxu0 0.0
    %459 = vmatpush.msra.mxu0 0.0
    %460 = vmatpush.msra.mxu0 0.0
    %461 = vmatpush.msra.mxu0 0.0
    %462 = vmatpush.msra.mxu0 0.0
    %463 = vmatpush.msra.mxu0 0.0
    %464 = vmatpush.msra.mxu0 0.0
    %465 = vmatpush.msra.mxu0 0.0
    %466 = vmatpush.msra.mxu0 0.0
    %467 = vmatpush.msra.mxu0 0.0
    %468 = vmatpush.msra.mxu0 %v109
    %469 = vmatpush.msra.mxu0 %v108
    %470 = vmatpush.msra.mxu0 %v107
    %471 = vmatpush.msra.mxu0 %v106
    %472 = vmatmul.f32.gmra.mxu0 %v454
    %v473 = vpop.f32.mrf.mxu0
    %v474 = vadd.f32 0.0, %v473
    %475 = vdwg.mxu0
    %v476 = vadd.f32 %v101, %v474
    %v477 = vmul.f32 %v476, 0.5
    %v478 = vtanh.pop %v477
    %v479 = vmul.f32 %v478, 0.5
    %v480 = vadd.f32 %v479, 0.5
    %v481 = vtanh.pop %v476
    %v482 = vmul.f32 %v480, %v436
    %484 = vrot.lane.b32.xlu0 %v481, 64
    %v485 = vpop.permute.xlu0 %484
    %v487 = vmul.f32 %v480, %v485
    %489 = vrot.lane.b32.xlu0 %v487, 32
    %v490 = vpop.permute.xlu0 %489
    %v492 = vadd.f32 %v482, %v490
    %v493 = vtanh.pop %v492
    %495 = vrot.lane.b32.xlu0 %v493, 64
    %v496 = vpop.permute.xlu0 %495
    %v498 = vmul.f32 %v480, %v496
    %v499 = vmul.f32 %v498, %v161
    %501 = vrot.lane.b32.xlu0 %v499, 32
    %v502 = vpop.permute.xlu0 %501
    %v504 = vsel %vm111, %v502, 0.0
    %505 = vadd.xlane.f32.xlu0 %v504
    %v506 = vpop.xlane.xlu0 %505
    %508 = vrot.lane.b32.xlu0 %v498, 32
    %v509 = vpop.permute.xlu0 %508
    %v510 = vsel %vm111, %v509, 0
    %512 = vmatpush.msra.mxu0 0.0
    %513 = vmatpush.msra.mxu0 0.0
    %514 = vmatpush.msra.mxu0 0.0
    %515 = vmatpush.msra.mxu0 0.0
    %516 = vmatpush.msra.mxu0 0.0
    %517 = vmatpush.msra.mxu0 0.0
    %518 = vmatpush.msra.mxu0 0.0
    %519 = vmatpush.msra.mxu0 0.0
    %520 = vmatpush.msra.mxu0 0.0
    %521 = vmatpush.msra.mxu0 0.0
    %522 = vmatpush.msra.mxu0 0.0
    %523 = vmatpush.msra.mxu0 0.0
    %524 = vmatpush.msra.mxu0 %v109
    %525 = vmatpush.msra.mxu0 %v108
    %526 = vmatpush.msra.mxu0 %v107
    %527 = vmatpush.msra.mxu0 %v106
    %528 = vmatmul.f32.gmra.mxu0 %v510
    %v529 = vpop.f32.mrf.mxu0
    %v530 = vadd.f32 0.0, %v529
    %531 = vdwg.mxu0
    %v532 = vadd.f32 %v104, %v530
    %v533 = vmul.f32 %v532, 0.5
    %v534 = vtanh.pop %v533
    %v535 = vmul.f32 %v534, 0.5
    %v536 = vadd.f32 %v535, 0.5
    %v537 = vtanh.pop %v532
    %v538 = vmul.f32 %v536, %v492
    %540 = vrot.lane.b32.xlu0 %v537, 64
    %v541 = vpop.permute.xlu0 %540
    %v543 = vmul.f32 %v536, %v541
    %545 = vrot.lane.b32.xlu0 %v543, 32
    %v546 = vpop.permute.xlu0 %545
    %v548 = vadd.f32 %v538, %v546
    %v549 = vtanh.pop %v548
    %551 = vrot.lane.b32.xlu0 %v549, 64
    %v552 = vpop.permute.xlu0 %551
    %v554 = vmul.f32 %v536, %v552
    %v555 = vmul.f32 %v554, %v161
    %557 = vrot.lane.b32.xlu0 %v555, 32
    %v558 = vpop.permute.xlu0 %557
    %v560 = vsel %vm111, %v558, 0.0
    %561 = vadd.xlane.f32.xlu0 %v560
    %v562 = vpop.xlane.xlu0 %561
    %vm563 = vcmask 7168
    %v564 = vsel %vm563, %v170, %v226
    %vm565 = vcmask 15360
    %v566 = vsel %vm565, %v564, %v282
    %vm567 = vcmask 23552
    %v568 = vsel %vm567, %v566, %v338
    %vm569 = vcmask 31744
    %v570 = vsel %vm569, %v568, %v394
    %vm571 = vcmask 39936
    %v572 = vsel %vm571, %v570, %v450
    %vm573 = vcmask 48128
    %v574 = vsel %vm573, %v572, %v506
    %vm575 = vcmask 56320
    %v576 = vsel %vm575, %v574, %v562
    %v577 = vld [vmem:[#allocation2] sm:$0x1]
    %v579 = vperm.slane %v577, 0
    %580 = vset.pattern.permute.xlu0 0
    %581 = vperm.xlu0 %580, %v579
    %v582 = vpop.permute.xlu0 %581
    %v584 = vadd.f32 %v576, %v582
    %vm585 = vcmask 64512
    %586 = vst.msk [vmem:[#allocation3] sm:$0xff] %vm585, %v584
    // Predicated region
    $region26: #{tpu_custom_call.1} parent=1 // pred_check
      _
    $region27: #{tpu_custom_call.1} parent=1 // pred_check_branch
      %588 = sbr.rel (0) target = $region29
    $region28: #{tpu_custom_call.1} parent=1 // pred_region
      %590 = vsyncadd [#allocation4], 0
      %s592 = sshll.u32 [#allocation3], 4
      %s593 = int_to_ptr.vmem [resolvable:$true] %s592
      %s594 = sshll.u32 %s6, 4
      %s595 = int_to_ptr.hbm [resolvable:$true] %s594
      %597 = dma.vmem_to_hbm [thread:$0]  %s593, 128, %s595, [#allocation4]
    $region29: #{tpu_custom_call.1} parent=1 // pred_fallthru
      _
    // Predicated region
    $region30: #{tpu_custom_call.1} parent=1 // pred_check
      _
    $region31: #{tpu_custom_call.1} parent=1 // pred_check_branch
      %599 = sbr.rel (0) target = $region33
    $region32: #{tpu_custom_call.1} parent=1 // pred_region
      %601 = dma.done [#allocation4], 128
    $region33: #{tpu_custom_call.1} parent=1 // pred_fallthru
      _
    %602 = vsyncpa [#allocation4], 1

</llo_original>
